<compile_context>
chip_gen: v7x
topology: tpu7x:2x2x1
jax: 0.10.0
libtpu: 0.0.40
codegen_flags: <defaults>
</compile_context>

<pallas_src>
import functools

import jax
import jax.numpy as jnp
from jax.experimental import pallas as pl
from jax.experimental.pallas import tpu as pltpu


# ----------------------------------------------------------------------------
# Kernel
# ----------------------------------------------------------------------------
def _batchnorm(h, gamma, beta, eps=1e-5):
    # BatchNorm1d, training-mode forward: stats over the node (batch) axis,
    # biased variance, affine transform.  rsqrt is evaluated once on the
    # (1, E) stats row (EUP slot) and pre-folded with gamma.
    mean = jnp.mean(h, axis=0, keepdims=True)
    var = jnp.mean((h - mean) ** 2, axis=0, keepdims=True)
    scale = jax.lax.rsqrt(var + eps) * gamma          # (1, E)
    return (h - mean) * scale + beta


def fused_forward_kernel(x_ref, a_ref,
                         wmix_ref, bmix_ref,
                         g1_ref, be1_ref,
                         w1_ref, b1_ref, w2_ref,
                         g2_ref, be2_ref,
                         wcls_ref, bcls_ref,
                         o_ref, *, depth):
    x = x_ref[...]                                    # (N, Ep) f32
    a = a_ref[...]                                    # (N, N)  bf16

    for d in range(depth):                            # static unroll (depth small)
        # --- GCN mixing: A_hat @ (X @ W_mix) + b_mix (bf16 operands, f32 acc) ---
        xw = jnp.dot(x.astype(jnp.bfloat16), wmix_ref[d],
                     preferred_element_type=jnp.float32)
        mixed = jnp.dot(a, xw.astype(jnp.bfloat16),
                        preferred_element_type=jnp.float32) + bmix_ref[d]

        # --- residual + BatchNorm1 ---
        h = _batchnorm(mixed + x, g1_ref[d], be1_ref[d])

        # --- feedforward: Linear -> ReLU -> Linear(no bias) ---
        f = jnp.dot(h.astype(jnp.bfloat16), w1_ref[d],
                    preferred_element_type=jnp.float32) + b1_ref[d]
        f = jnp.maximum(f, 0.0)
        f = jnp.dot(f.astype(jnp.bfloat16), w2_ref[d],
                    preferred_element_type=jnp.float32)

        # --- residual + BatchNorm2 ---
        x = _batchnorm(f + h, g2_ref[d], be2_ref[d])

    # --- classifier head (lane-dense padded output) ---
    o_ref[...] = (jnp.dot(x.astype(jnp.bfloat16), wcls_ref[...],
                          preferred_element_type=jnp.float32) + bcls_ref[...])


# ----------------------------------------------------------------------------
# Wrapper (whole problem fits in VMEM -> single-block, no grid pipelining)
# ----------------------------------------------------------------------------
_VMEM = pl.BlockSpec(memory_space=pltpu.MemorySpace.VMEM)


def _round_up(x, m):
    return (x + m - 1) // m * m


def _pad_axis(x, axis, target):
    pad = target - x.shape[axis]
    if pad == 0:
        return x
    cfg = [(0, 0)] * x.ndim
    cfg[axis] = (0, pad)
    return jnp.pad(x, cfg)


@jax.jit
def node_classifier_forward(nodes, a_hat, block_params, w_cls, b_cls):
    n, emb = nodes.shape
    numcls = w_cls.shape[1]
    depth = len(block_params)
    hid = block_params[0]["w1"].shape[1]

    ep = _round_up(emb, 128)       # lane-dense embedding dim
    hp = _round_up(hid, 128)       # lane-dense ff hidden dim
    cp = _round_up(numcls, 128)    # lane-dense class dim

    def stack(name):
        return jnp.stack([p[name] for p in block_params])

    bf16 = jnp.bfloat16
    x0 = _pad_axis(nodes, 1, ep)                                              # (N, Ep) f32
    a_bf = a_hat.astype(bf16)                                                 # (N, N)
    w_mix = _pad_axis(_pad_axis(stack("w_mix"), 1, ep), 2, ep).astype(bf16)   # (D, Ep, Ep)
    b_mix = _pad_axis(stack("b_mix"), 2, ep)                                  # (D, 1, Ep)
    g1 = _pad_axis(stack("g1"), 2, ep)
    be1 = _pad_axis(stack("be1"), 2, ep)
    w1 = _pad_axis(_pad_axis(stack("w1"), 1, ep), 2, hp).astype(bf16)         # (D, Ep, Hp)
    b1 = _pad_axis(stack("b1"), 2, hp)                                        # (D, 1, Hp)
    w2 = _pad_axis(_pad_axis(stack("w2"), 1, hp), 2, ep).astype(bf16)         # (D, Hp, Ep)
    g2 = _pad_axis(stack("g2"), 2, ep)
    be2 = _pad_axis(stack("be2"), 2, ep)
    wc = _pad_axis(_pad_axis(w_cls, 0, ep), 1, cp).astype(bf16)               # (Ep, Cp)
    bc = _pad_axis(b_cls, 1, cp)                                              # (1, Cp)

    args = (x0, a_bf, w_mix, b_mix, g1, be1, w1, b1, w2, g2, be2, wc, bc)
    out = pl.pallas_call(
        functools.partial(fused_forward_kernel, depth=depth),
        out_shape=jax.ShapeDtypeStruct((n, cp), jnp.float32),
        in_specs=[_VMEM] * len(args),
        out_specs=_VMEM,
    )(*args)
    # TODO(synk): if N ever scales to thousands of nodes, the dense (N,N) A_hat
    # no longer fits VMEM (esp. v7x 64 MiB) — switch to a row-tiled grid over A.
    return out[:, :numcls]


# ----------------------------------------------------------------------------
# Parameter / adjacency construction (plain-JAX glue)
# ----------------------------------------------------------------------------
def build_adjacency(edges, n):
    """Symmetric-normalized adjacency with self-loops: D^-1/2 (A + I) D^-1/2."""
    a = jnp.zeros((n, n), jnp.float32)
    for _, (src, dst) in edges.items():
        src = jnp.asarray(src, jnp.int32)
        dst = jnp.asarray(dst, jnp.int32)
        a = a.at[src, dst].set(1.0)
        a = a.at[dst, src].set(1.0)
    a = a + jnp.eye(n, dtype=jnp.float32)
    d = jnp.sum(a, axis=1)
    d_inv_sqrt = 1.0 / jnp.sqrt(d)
    return a * d_inv_sqrt[:, None] * d_inv_sqrt[None, :]


def init_block_params(key, emb, mult):
    ks = jax.random.split(key, 4)
    hid = mult * emb
    return {
        "w_mix": jax.random.normal(ks[0], (emb, emb), jnp.float32) / jnp.sqrt(emb),
        "b_mix": jnp.zeros((1, emb), jnp.float32),
        "g1": jnp.ones((1, emb), jnp.float32),
        "be1": jnp.zeros((1, emb), jnp.float32),
        "w1": jax.random.normal(ks[1], (emb, hid), jnp.float32) / jnp.sqrt(emb),
        "b1": jax.random.normal(ks[2], (1, hid), jnp.float32) * 0.01,
        "w2": jax.random.normal(ks[3], (hid, emb), jnp.float32) / jnp.sqrt(hid),
        "g2": jnp.ones((1, emb), jnp.float32),
        "be2": jnp.zeros((1, emb), jnp.float32),
    }


if __name__ == "__main__":
    n = 16        # number of graph nodes
    emb = 32      # embedding size
    numcls = 4    # number of classes
    depth = 2     # number of GraphBlocks
    mult = 4      # ff hidden multiplier

    key = jax.random.PRNGKey(0)
    k_nodes, k_edges, k_blocks, k_cls = jax.random.split(key, 4)

    # deterministic synthetic multi-relational edge dict {rel: (src_list, dst_list)}
    ke1, ke2 = jax.random.split(k_edges)
    edges = {
        0: (jax.random.randint(ke1, (24,), 0, n), jax.random.randint(ke2, (24,), 0, n)),
        1: (jax.random.randint(ke2, (24,), 0, n), jax.random.randint(ke1, (24,), 0, n)),
    }
    a_hat = build_adjacency(edges, n)

    # nn.Parameter(torch.randn(n, emb))
    nodes = jax.random.normal(k_nodes, (n, emb), jnp.float32)

    block_keys = jax.random.split(k_blocks, depth)
    block_params = [init_block_params(bk, emb, mult) for bk in block_keys]

    kc1, kc2 = jax.random.split(k_cls)
    w_cls = jax.random.normal(kc1, (emb, numcls), jnp.float32) / jnp.sqrt(emb)
    b_cls = jax.random.normal(kc2, (1, numcls), jnp.float32) * 0.01

    logits = node_classifier_forward(nodes, a_hat, block_params, w_cls, b_cls)
    logits = jax.block_until_ready(logits)
    assert logits.shape == (n, numcls)
    assert bool(jnp.all(jnp.isfinite(logits)))
    print("KERNEL_OK")
</pallas_src>

<mosaic_0001>
module attributes {stable_mosaic.version = 11 : i64} {
  func.func @fused_forward_kernel(%arg0: memref<16x128xf32, #tpu.memory_space<vmem>>, %arg1: memref<16x16xbf16, #tpu.memory_space<vmem>>, %arg2: memref<2x128x128xbf16, #tpu.memory_space<vmem>>, %arg3: memref<2x1x128xf32, #tpu.memory_space<vmem>>, %arg4: memref<2x1x128xf32, #tpu.memory_space<vmem>>, %arg5: memref<2x1x128xf32, #tpu.memory_space<vmem>>, %arg6: memref<2x128x128xbf16, #tpu.memory_space<vmem>>, %arg7: memref<2x1x128xf32, #tpu.memory_space<vmem>>, %arg8: memref<2x128x128xbf16, #tpu.memory_space<vmem>>, %arg9: memref<2x1x128xf32, #tpu.memory_space<vmem>>, %arg10: memref<2x1x128xf32, #tpu.memory_space<vmem>>, %arg11: memref<128x128xbf16, #tpu.memory_space<vmem>>, %arg12: memref<1x128xf32, #tpu.memory_space<vmem>>, %arg13: memref<16x128xf32, #tpu.memory_space<vmem>>) attributes {dimension_semantics = [], scalar_prefetch = 0 : i64, scratch_operands = 0 : i64, tpu.core_type = #tpu.core_type<tc>} {
    %c0 = arith.constant 0 : index
    %c0_0 = arith.constant 0 : index
    %0 = vector.load %arg0[%c0, %c0_0] : memref<16x128xf32, #tpu.memory_space<vmem>>, vector<16x128xf32>
    %c0_1 = arith.constant 0 : index
    %c0_2 = arith.constant 0 : index
    %1 = vector.load %arg1[%c0_1, %c0_2] : memref<16x16xbf16, #tpu.memory_space<vmem>>, vector<16x16xbf16>
    %2 = arith.truncf %0 : vector<16x128xf32> to vector<16x128xbf16>
    %c0_3 = arith.constant 0 : index
    %c0_4 = arith.constant 0 : index
    %c0_5 = arith.constant 0 : index
    %3 = vector.load %arg2[%c0_3, %c0_4, %c0_5] : memref<2x128x128xbf16, #tpu.memory_space<vmem>>, vector<1x128x128xbf16>
    %4 = vector.shape_cast %3 : vector<1x128x128xbf16> to vector<128x128xbf16>
    %cst = arith.constant dense<0.000000e+00> : vector<16x128xf32>
    %5 = tpu.matmul %2, %4, %cst {dimension_numbers = #tpu.dot_dimension_numbers<[1], [0], [0], [1], [0, 0, 1, 1], [], []>} : vector<16x128xbf16>, vector<128x128xbf16>, vector<16x128xf32> -> vector<16x128xf32>
    %6 = arith.truncf %5 : vector<16x128xf32> to vector<16x128xbf16>
    %cst_6 = arith.constant dense<0.000000e+00> : vector<16x128xf32>
    %7 = tpu.matmul %1, %6, %cst_6 {dimension_numbers = #tpu.dot_dimension_numbers<[1], [0], [0], [1], [0, 0, 1, 1], [], []>} : vector<16x16xbf16>, vector<16x128xbf16>, vector<16x128xf32> -> vector<16x128xf32>
    %c0_7 = arith.constant 0 : index
    %c0_8 = arith.constant 0 : index
    %c0_9 = arith.constant 0 : index
    %8 = vector.load %arg3[%c0_7, %c0_8, %c0_9] : memref<2x1x128xf32, #tpu.memory_space<vmem>>, vector<1x1x128xf32>
    %9 = vector.shape_cast %8 : vector<1x1x128xf32> to vector<1x128xf32>
    %10 = vector.broadcast %9 : vector<1x128xf32> to vector<16x128xf32>
    %11 = arith.addf %7, %10 : vector<16x128xf32>
    %12 = arith.addf %11, %0 : vector<16x128xf32>
    %c0_10 = arith.constant 0 : index
    %c0_11 = arith.constant 0 : index
    %c0_12 = arith.constant 0 : index
    %13 = vector.load %arg4[%c0_10, %c0_11, %c0_12] : memref<2x1x128xf32, #tpu.memory_space<vmem>>, vector<1x1x128xf32>
    %14 = vector.shape_cast %13 : vector<1x1x128xf32> to vector<1x128xf32>
    %c0_13 = arith.constant 0 : index
    %c0_14 = arith.constant 0 : index
    %c0_15 = arith.constant 0 : index
    %15 = vector.load %arg5[%c0_13, %c0_14, %c0_15] : memref<2x1x128xf32, #tpu.memory_space<vmem>>, vector<1x1x128xf32>
    %16 = vector.shape_cast %15 : vector<1x1x128xf32> to vector<1x128xf32>
    %cst_16 = arith.constant dense<0.000000e+00> : vector<128xf32>
    %17 = vector.multi_reduction <add>, %12, %cst_16 [0] : vector<16x128xf32> to vector<128xf32>
    %18 = vector.shape_cast %17 : vector<128xf32> to vector<1x128xf32>
    %cst_17 = arith.constant 1.600000e+01 : f32
    %19 = vector.broadcast %cst_17 : f32 to vector<1x128xf32>
    %20 = arith.divf %18, %19 : vector<1x128xf32>
    %21 = vector.broadcast %20 : vector<1x128xf32> to vector<16x128xf32>
    %22 = arith.subf %12, %21 : vector<16x128xf32>
    %23 = arith.mulf %22, %22 : vector<16x128xf32>
    %cst_18 = arith.constant dense<0.000000e+00> : vector<128xf32>
    %24 = vector.multi_reduction <add>, %23, %cst_18 [0] : vector<16x128xf32> to vector<128xf32>
    %25 = vector.shape_cast %24 : vector<128xf32> to vector<1x128xf32>
    %cst_19 = arith.constant 1.600000e+01 : f32
    %26 = vector.broadcast %cst_19 : f32 to vector<1x128xf32>
    %27 = arith.divf %25, %26 : vector<1x128xf32>
    %cst_20 = arith.constant 9.99999974E-6 : f32
    %28 = vector.broadcast %cst_20 : f32 to vector<1x128xf32>
    %29 = arith.addf %27, %28 : vector<1x128xf32>
    %30 = math.rsqrt %29 : vector<1x128xf32>
    %31 = arith.mulf %30, %14 : vector<1x128xf32>
    %32 = vector.broadcast %20 : vector<1x128xf32> to vector<16x128xf32>
    %33 = arith.subf %12, %32 : vector<16x128xf32>
    %34 = vector.broadcast %31 : vector<1x128xf32> to vector<16x128xf32>
    %35 = arith.mulf %33, %34 : vector<16x128xf32>
    %36 = vector.broadcast %16 : vector<1x128xf32> to vector<16x128xf32>
    %37 = arith.addf %35, %36 : vector<16x128xf32>
    %38 = arith.truncf %37 : vector<16x128xf32> to vector<16x128xbf16>
    %c0_21 = arith.constant 0 : index
    %c0_22 = arith.constant 0 : index
    %c0_23 = arith.constant 0 : index
    %39 = vector.load %arg6[%c0_21, %c0_22, %c0_23] : memref<2x128x128xbf16, #tpu.memory_space<vmem>>, vector<1x128x128xbf16>
    %40 = vector.shape_cast %39 : vector<1x128x128xbf16> to vector<128x128xbf16>
    %cst_24 = arith.constant dense<0.000000e+00> : vector<16x128xf32>
    %41 = tpu.matmul %38, %40, %cst_24 {dimension_numbers = #tpu.dot_dimension_numbers<[1], [0], [0], [1], [0, 0, 1, 1], [], []>} : vector<16x128xbf16>, vector<128x128xbf16>, vector<16x128xf32> -> vector<16x128xf32>
    %c0_25 = arith.constant 0 : index
    %c0_26 = arith.constant 0 : index
    %c0_27 = arith.constant 0 : index
    %42 = vector.load %arg7[%c0_25, %c0_26, %c0_27] : memref<2x1x128xf32, #tpu.memory_space<vmem>>, vector<1x1x128xf32>
    %43 = vector.shape_cast %42 : vector<1x1x128xf32> to vector<1x128xf32>
    %44 = vector.broadcast %43 : vector<1x128xf32> to vector<16x128xf32>
    %45 = arith.addf %41, %44 : vector<16x128xf32>
    %cst_28 = arith.constant 0.000000e+00 : f32
    %46 = vector.broadcast %cst_28 : f32 to vector<16x128xf32>
    %47 = arith.maximumf %45, %46 : vector<16x128xf32>
    %48 = arith.truncf %47 : vector<16x128xf32> to vector<16x128xbf16>
    %c0_29 = arith.constant 0 : index
    %c0_30 = arith.constant 0 : index
    %c0_31 = arith.constant 0 : index
    %49 = vector.load %arg8[%c0_29, %c0_30, %c0_31] : memref<2x128x128xbf16, #tpu.memory_space<vmem>>, vector<1x128x128xbf16>
    %50 = vector.shape_cast %49 : vector<1x128x128xbf16> to vector<128x128xbf16>
    %cst_32 = arith.constant dense<0.000000e+00> : vector<16x128xf32>
    %51 = tpu.matmul %48, %50, %cst_32 {dimension_numbers = #tpu.dot_dimension_numbers<[1], [0], [0], [1], [0, 0, 1, 1], [], []>} : vector<16x128xbf16>, vector<128x128xbf16>, vector<16x128xf32> -> vector<16x128xf32>
    %52 = arith.addf %51, %37 : vector<16x128xf32>
    %c0_33 = arith.constant 0 : index
    %c0_34 = arith.constant 0 : index
    %c0_35 = arith.constant 0 : index
    %53 = vector.load %arg9[%c0_33, %c0_34, %c0_35] : memref<2x1x128xf32, #tpu.memory_space<vmem>>, vector<1x1x128xf32>
    %54 = vector.shape_cast %53 : vector<1x1x128xf32> to vector<1x128xf32>
    %c0_36 = arith.constant 0 : index
    %c0_37 = arith.constant 0 : index
    %c0_38 = arith.constant 0 : index
    %55 = vector.load %arg10[%c0_36, %c0_37, %c0_38] : memref<2x1x128xf32, #tpu.memory_space<vmem>>, vector<1x1x128xf32>
    %56 = vector.shape_cast %55 : vector<1x1x128xf32> to vector<1x128xf32>
    %cst_39 = arith.constant dense<0.000000e+00> : vector<128xf32>
    %57 = vector.multi_reduction <add>, %52, %cst_39 [0] : vector<16x128xf32> to vector<128xf32>
    %58 = vector.shape_cast %57 : vector<128xf32> to vector<1x128xf32>
    %cst_40 = arith.constant 1.600000e+01 : f32
    %59 = vector.broadcast %cst_40 : f32 to vector<1x128xf32>
    %60 = arith.divf %58, %59 : vector<1x128xf32>
    %61 = vector.broadcast %60 : vector<1x128xf32> to vector<16x128xf32>
    %62 = arith.subf %52, %61 : vector<16x128xf32>
    %63 = arith.mulf %62, %62 : vector<16x128xf32>
    %cst_41 = arith.constant dense<0.000000e+00> : vector<128xf32>
    %64 = vector.multi_reduction <add>, %63, %cst_41 [0] : vector<16x128xf32> to vector<128xf32>
    %65 = vector.shape_cast %64 : vector<128xf32> to vector<1x128xf32>
    %cst_42 = arith.constant 1.600000e+01 : f32
    %66 = vector.broadcast %cst_42 : f32 to vector<1x128xf32>
    %67 = arith.divf %65, %66 : vector<1x128xf32>
    %cst_43 = arith.constant 9.99999974E-6 : f32
    %68 = vector.broadcast %cst_43 : f32 to vector<1x128xf32>
    %69 = arith.addf %67, %68 : vector<1x128xf32>
    %70 = math.rsqrt %69 : vector<1x128xf32>
    %71 = arith.mulf %70, %54 : vector<1x128xf32>
    %72 = vector.broadcast %60 : vector<1x128xf32> to vector<16x128xf32>
    %73 = arith.subf %52, %72 : vector<16x128xf32>
    %74 = vector.broadcast %71 : vector<1x128xf32> to vector<16x128xf32>
    %75 = arith.mulf %73, %74 : vector<16x128xf32>
    %76 = vector.broadcast %56 : vector<1x128xf32> to vector<16x128xf32>
    %77 = arith.addf %75, %76 : vector<16x128xf32>
    %78 = arith.truncf %77 : vector<16x128xf32> to vector<16x128xbf16>
    %c1 = arith.constant 1 : index
    %c0_44 = arith.constant 0 : index
    %c0_45 = arith.constant 0 : index
    %79 = vector.load %arg2[%c1, %c0_44, %c0_45] : memref<2x128x128xbf16, #tpu.memory_space<vmem>>, vector<1x128x128xbf16>
    %80 = vector.shape_cast %79 : vector<1x128x128xbf16> to vector<128x128xbf16>
    %cst_46 = arith.constant dense<0.000000e+00> : vector<16x128xf32>
    %81 = tpu.matmul %78, %80, %cst_46 {dimension_numbers = #tpu.dot_dimension_numbers<[1], [0], [0], [1], [0, 0, 1, 1], [], []>} : vector<16x128xbf16>, vector<128x128xbf16>, vector<16x128xf32> -> vector<16x128xf32>
    %82 = arith.truncf %81 : vector<16x128xf32> to vector<16x128xbf16>
    %cst_47 = arith.constant dense<0.000000e+00> : vector<16x128xf32>
    %83 = tpu.matmul %1, %82, %cst_47 {dimension_numbers = #tpu.dot_dimension_numbers<[1], [0], [0], [1], [0, 0, 1, 1], [], []>} : vector<16x16xbf16>, vector<16x128xbf16>, vector<16x128xf32> -> vector<16x128xf32>
    %c1_48 = arith.constant 1 : index
    %c0_49 = arith.constant 0 : index
    %c0_50 = arith.constant 0 : index
    %84 = vector.load %arg3[%c1_48, %c0_49, %c0_50] : memref<2x1x128xf32, #tpu.memory_space<vmem>>, vector<1x1x128xf32>
    %85 = vector.shape_cast %84 : vector<1x1x128xf32> to vector<1x128xf32>
    %86 = vector.broadcast %85 : vector<1x128xf32> to vector<16x128xf32>
    %87 = arith.addf %83, %86 : vector<16x128xf32>
    %88 = arith.addf %87, %77 : vector<16x128xf32>
    %c1_51 = arith.constant 1 : index
    %c0_52 = arith.constant 0 : index
    %c0_53 = arith.constant 0 : index
    %89 = vector.load %arg4[%c1_51, %c0_52, %c0_53] : memref<2x1x128xf32, #tpu.memory_space<vmem>>, vector<1x1x128xf32>
    %90 = vector.shape_cast %89 : vector<1x1x128xf32> to vector<1x128xf32>
    %c1_54 = arith.constant 1 : index
    %c0_55 = arith.constant 0 : index
    %c0_56 = arith.constant 0 : index
    %91 = vector.load %arg5[%c1_54, %c0_55, %c0_56] : memref<2x1x128xf32, #tpu.memory_space<vmem>>, vector<1x1x128xf32>
    %92 = vector.shape_cast %91 : vector<1x1x128xf32> to vector<1x128xf32>
    %cst_57 = arith.constant dense<0.000000e+00> : vector<128xf32>
    %93 = vector.multi_reduction <add>, %88, %cst_57 [0] : vector<16x128xf32> to vector<128xf32>
    %94 = vector.shape_cast %93 : vector<128xf32> to vector<1x128xf32>
    %cst_58 = arith.constant 1.600000e+01 : f32
    %95 = vector.broadcast %cst_58 : f32 to vector<1x128xf32>
    %96 = arith.divf %94, %95 : vector<1x128xf32>
    %97 = vector.broadcast %96 : vector<1x128xf32> to vector<16x128xf32>
    %98 = arith.subf %88, %97 : vector<16x128xf32>
    %99 = arith.mulf %98, %98 : vector<16x128xf32>
    %cst_59 = arith.constant dense<0.000000e+00> : vector<128xf32>
    %100 = vector.multi_reduction <add>, %99, %cst_59 [0] : vector<16x128xf32> to vector<128xf32>
    %101 = vector.shape_cast %100 : vector<128xf32> to vector<1x128xf32>
    %cst_60 = arith.constant 1.600000e+01 : f32
    %102 = vector.broadcast %cst_60 : f32 to vector<1x128xf32>
    %103 = arith.divf %101, %102 : vector<1x128xf32>
    %cst_61 = arith.constant 9.99999974E-6 : f32
    %104 = vector.broadcast %cst_61 : f32 to vector<1x128xf32>
    %105 = arith.addf %103, %104 : vector<1x128xf32>
    %106 = math.rsqrt %105 : vector<1x128xf32>
    %107 = arith.mulf %106, %90 : vector<1x128xf32>
    %108 = vector.broadcast %96 : vector<1x128xf32> to vector<16x128xf32>
    %109 = arith.subf %88, %108 : vector<16x128xf32>
    %110 = vector.broadcast %107 : vector<1x128xf32> to vector<16x128xf32>
    %111 = arith.mulf %109, %110 : vector<16x128xf32>
    %112 = vector.broadcast %92 : vector<1x128xf32> to vector<16x128xf32>
    %113 = arith.addf %111, %112 : vector<16x128xf32>
    %114 = arith.truncf %113 : vector<16x128xf32> to vector<16x128xbf16>
    %c1_62 = arith.constant 1 : index
    %c0_63 = arith.constant 0 : index
    %c0_64 = arith.constant 0 : index
    %115 = vector.load %arg6[%c1_62, %c0_63, %c0_64] : memref<2x128x128xbf16, #tpu.memory_space<vmem>>, vector<1x128x128xbf16>
    %116 = vector.shape_cast %115 : vector<1x128x128xbf16> to vector<128x128xbf16>
    %cst_65 = arith.constant dense<0.000000e+00> : vector<16x128xf32>
    %117 = tpu.matmul %114, %116, %cst_65 {dimension_numbers = #tpu.dot_dimension_numbers<[1], [0], [0], [1], [0, 0, 1, 1], [], []>} : vector<16x128xbf16>, vector<128x128xbf16>, vector<16x128xf32> -> vector<16x128xf32>
    %c1_66 = arith.constant 1 : index
    %c0_67 = arith.constant 0 : index
    %c0_68 = arith.constant 0 : index
    %118 = vector.load %arg7[%c1_66, %c0_67, %c0_68] : memref<2x1x128xf32, #tpu.memory_space<vmem>>, vector<1x1x128xf32>
    %119 = vector.shape_cast %118 : vector<1x1x128xf32> to vector<1x128xf32>
    %120 = vector.broadcast %119 : vector<1x128xf32> to vector<16x128xf32>
    %121 = arith.addf %117, %120 : vector<16x128xf32>
    %cst_69 = arith.constant 0.000000e+00 : f32
    %122 = vector.broadcast %cst_69 : f32 to vector<16x128xf32>
    %123 = arith.maximumf %121, %122 : vector<16x128xf32>
    %124 = arith.truncf %123 : vector<16x128xf32> to vector<16x128xbf16>
    %c1_70 = arith.constant 1 : index
    %c0_71 = arith.constant 0 : index
    %c0_72 = arith.constant 0 : index
    %125 = vector.load %arg8[%c1_70, %c0_71, %c0_72] : memref<2x128x128xbf16, #tpu.memory_space<vmem>>, vector<1x128x128xbf16>
    %126 = vector.shape_cast %125 : vector<1x128x128xbf16> to vector<128x128xbf16>
    %cst_73 = arith.constant dense<0.000000e+00> : vector<16x128xf32>
    %127 = tpu.matmul %124, %126, %cst_73 {dimension_numbers = #tpu.dot_dimension_numbers<[1], [0], [0], [1], [0, 0, 1, 1], [], []>} : vector<16x128xbf16>, vector<128x128xbf16>, vector<16x128xf32> -> vector<16x128xf32>
    %128 = arith.addf %127, %113 : vector<16x128xf32>
    %c1_74 = arith.constant 1 : index
    %c0_75 = arith.constant 0 : index
    %c0_76 = arith.constant 0 : index
    %129 = vector.load %arg9[%c1_74, %c0_75, %c0_76] : memref<2x1x128xf32, #tpu.memory_space<vmem>>, vector<1x1x128xf32>
    %130 = vector.shape_cast %129 : vector<1x1x128xf32> to vector<1x128xf32>
    %c1_77 = arith.constant 1 : index
    %c0_78 = arith.constant 0 : index
    %c0_79 = arith.constant 0 : index
    %131 = vector.load %arg10[%c1_77, %c0_78, %c0_79] : memref<2x1x128xf32, #tpu.memory_space<vmem>>, vector<1x1x128xf32>
    %132 = vector.shape_cast %131 : vector<1x1x128xf32> to vector<1x128xf32>
    %cst_80 = arith.constant dense<0.000000e+00> : vector<128xf32>
    %133 = vector.multi_reduction <add>, %128, %cst_80 [0] : vector<16x128xf32> to vector<128xf32>
    %134 = vector.shape_cast %133 : vector<128xf32> to vector<1x128xf32>
    %cst_81 = arith.constant 1.600000e+01 : f32
    %135 = vector.broadcast %cst_81 : f32 to vector<1x128xf32>
    %136 = arith.divf %134, %135 : vector<1x128xf32>
    %137 = vector.broadcast %136 : vector<1x128xf32> to vector<16x128xf32>
    %138 = arith.subf %128, %137 : vector<16x128xf32>
    %139 = arith.mulf %138, %138 : vector<16x128xf32>
    %cst_82 = arith.constant dense<0.000000e+00> : vector<128xf32>
    %140 = vector.multi_reduction <add>, %139, %cst_82 [0] : vector<16x128xf32> to vector<128xf32>
    %141 = vector.shape_cast %140 : vector<128xf32> to vector<1x128xf32>
    %cst_83 = arith.constant 1.600000e+01 : f32
    %142 = vector.broadcast %cst_83 : f32 to vector<1x128xf32>
    %143 = arith.divf %141, %142 : vector<1x128xf32>
    %cst_84 = arith.constant 9.99999974E-6 : f32
    %144 = vector.broadcast %cst_84 : f32 to vector<1x128xf32>
    %145 = arith.addf %143, %144 : vector<1x128xf32>
    %146 = math.rsqrt %145 : vector<1x128xf32>
    %147 = arith.mulf %146, %130 : vector<1x128xf32>
    %148 = vector.broadcast %136 : vector<1x128xf32> to vector<16x128xf32>
    %149 = arith.subf %128, %148 : vector<16x128xf32>
    %150 = vector.broadcast %147 : vector<1x128xf32> to vector<16x128xf32>
    %151 = arith.mulf %149, %150 : vector<16x128xf32>
    %152 = vector.broadcast %132 : vector<1x128xf32> to vector<16x128xf32>
    %153 = arith.addf %151, %152 : vector<16x128xf32>
    %154 = arith.truncf %153 : vector<16x128xf32> to vector<16x128xbf16>
    %c0_85 = arith.constant 0 : index
    %c0_86 = arith.constant 0 : index
    %155 = vector.load %arg11[%c0_85, %c0_86] : memref<128x128xbf16, #tpu.memory_space<vmem>>, vector<128x128xbf16>
    %cst_87 = arith.constant dense<0.000000e+00> : vector<16x128xf32>
    %156 = tpu.matmul %154, %155, %cst_87 {dimension_numbers = #tpu.dot_dimension_numbers<[1], [0], [0], [1], [0, 0, 1, 1], [], []>} : vector<16x128xbf16>, vector<128x128xbf16>, vector<16x128xf32> -> vector<16x128xf32>
    %c0_88 = arith.constant 0 : index
    %c0_89 = arith.constant 0 : index
    %157 = vector.load %arg12[%c0_88, %c0_89] : memref<1x128xf32, #tpu.memory_space<vmem>>, vector<1x128xf32>
    %158 = vector.broadcast %157 : vector<1x128xf32> to vector<16x128xf32>
    %159 = arith.addf %156, %158 : vector<16x128xf32>
    %c0_90 = arith.constant 0 : index
    %c0_91 = arith.constant 0 : index
    %160 = vector.load %arg13[%c0_90, %c0_91] : memref<16x128xf32, #tpu.memory_space<vmem>>, vector<16x128xf32>
    tpu.vector_store %arg13[%c0_90, %c0_91], %159 {strides = array<i32>} : memref<16x128xf32, #tpu.memory_space<vmem>>, vector<16x128xf32>,
    return
  }
}

</mosaic_0001>

<llo_original>
// kernel: node_classifier_forward.1
$region0: #{node_classifier_forward.1}
  #allocation0 [shape = 'u32[]', space=smem, size = 0x4, offset = 0x4, fixed_abs, tag = 'smem constant byte address 0x4 - core index']
  #allocation1 [shape = 'u32[144,128]{1,0:T(1,128)}', space=vmem, size = 0x12000, scoped, tag = 'internal scratch']
  %s0 = inlined_call_operand.vmem [shape: f32[16,128], index: 0, kind: input, shape index: {}]
  %s1 = inlined_call_operand.vmem [shape: bf16[16,16], index: 1, kind: input, shape index: {}]
  %s2 = inlined_call_operand.vmem [shape: bf16[2,128,128], index: 2, kind: input, shape index: {}]
  %s3 = inlined_call_operand.vmem [shape: f32[2,1,128], index: 3, kind: input, shape index: {}]
  %s4 = inlined_call_operand.vmem [shape: f32[2,1,128], index: 4, kind: input, shape index: {}]
  %s5 = inlined_call_operand.vmem [shape: f32[2,1,128], index: 5, kind: input, shape index: {}]
  %s6 = inlined_call_operand.vmem [shape: bf16[2,128,128], index: 6, kind: input, shape index: {}]
  %s7 = inlined_call_operand.vmem [shape: f32[2,1,128], index: 7, kind: input, shape index: {}]
  %s8 = inlined_call_operand.vmem [shape: bf16[2,128,128], index: 8, kind: input, shape index: {}]
  %s9 = inlined_call_operand.vmem [shape: f32[2,1,128], index: 9, kind: input, shape index: {}]
  %s10 = inlined_call_operand.vmem [shape: f32[2,1,128], index: 10, kind: input, shape index: {}]
  %s11 = inlined_call_operand.vmem [shape: bf16[128,128], index: 11, kind: input, shape index: {}]
  %s12 = inlined_call_operand.vmem [shape: f32[1,128], index: 12, kind: input, shape index: {}]
  %s13 = inlined_call_operand.vmem [shape: f32[16,128], index: 13, kind: output, shape index: {}]
  %s14 = sld [smem:[#allocation0]]
  $region62: #{node_classifier_forward.1} parent=0
    _
  %s16 = ssub.s32 1, %s14
  %s17 = scalar_select 0, %s16, %s14
  // Predicated region
  $region2: #{node_classifier_forward.1} parent=0 // pred_check
    _
  $region3: #{node_classifier_forward.1} parent=0 // pred_check_branch
    %19 = sbr.rel (0) target = $region5
  $region4: #{node_classifier_forward.1} parent=0 // pred_region
    _
  $region5: #{node_classifier_forward.1} parent=0 // pred_fallthru
    _
  // Predicated region
  $region6: #{node_classifier_forward.1} parent=0 // pred_check
    _
  $region7: #{node_classifier_forward.1} parent=0 // pred_check_branch
    %21 = sbr.rel (0) target = $region9
  $region8: #{node_classifier_forward.1} parent=0 // pred_region
    _
  $region9: #{node_classifier_forward.1} parent=0 // pred_fallthru
    _
  // Predicated region
  $region10: #{node_classifier_forward.1} parent=0 // pred_check
    _
  $region11: #{node_classifier_forward.1} parent=0 // pred_check_branch
    %23 = sbr.rel (0) target = $region13
  $region12: #{node_classifier_forward.1} parent=0 // pred_region
    _
  $region13: #{node_classifier_forward.1} parent=0 // pred_fallthru
    _
  // Predicated region
  $region14: #{node_classifier_forward.1} parent=0 // pred_check
    _
  $region15: #{node_classifier_forward.1} parent=0 // pred_check_branch
    %25 = sbr.rel (0) target = $region17
  $region16: #{node_classifier_forward.1} parent=0 // pred_region
    _
  $region17: #{node_classifier_forward.1} parent=0 // pred_fallthru
    _
  // Predicated region
  $region18: #{node_classifier_forward.1} parent=0 // pred_check
    _
  $region19: #{node_classifier_forward.1} parent=0 // pred_check_branch
    %27 = sbr.rel (0) target = $region21
  $region20: #{node_classifier_forward.1} parent=0 // pred_region
    _
  $region21: #{node_classifier_forward.1} parent=0 // pred_fallthru
    _
  // Predicated region
  $region22: #{node_classifier_forward.1} parent=0 // pred_check
    _
  $region23: #{node_classifier_forward.1} parent=0 // pred_check_branch
    %29 = sbr.rel (0) target = $region25
  $region24: #{node_classifier_forward.1} parent=0 // pred_region
    _
  $region25: #{node_classifier_forward.1} parent=0 // pred_fallthru
    _
  // Predicated region
  $region26: #{node_classifier_forward.1} parent=0 // pred_check
    _
  $region27: #{node_classifier_forward.1} parent=0 // pred_check_branch
    %31 = sbr.rel (0) target = $region29
  $region28: #{node_classifier_forward.1} parent=0 // pred_region
    _
  $region29: #{node_classifier_forward.1} parent=0 // pred_fallthru
    _
  // Predicated region
  $region30: #{node_classifier_forward.1} parent=0 // pred_check
    _
  $region31: #{node_classifier_forward.1} parent=0 // pred_check_branch
    %33 = sbr.rel (0) target = $region33
  $region32: #{node_classifier_forward.1} parent=0 // pred_region
    _
  $region33: #{node_classifier_forward.1} parent=0 // pred_fallthru
    _
  // Predicated region
  $region34: #{node_classifier_forward.1} parent=0 // pred_check
    _
  $region35: #{node_classifier_forward.1} parent=0 // pred_check_branch
    %35 = sbr.rel (0) target = $region37
  $region36: #{node_classifier_forward.1} parent=0 // pred_region
    _
  $region37: #{node_classifier_forward.1} parent=0 // pred_fallthru
    _
  // Predicated region
  $region38: #{node_classifier_forward.1} parent=0 // pred_check
    _
  $region39: #{node_classifier_forward.1} parent=0 // pred_check_branch
    %37 = sbr.rel (0) target = $region41
  $region40: #{node_classifier_forward.1} parent=0 // pred_region
    _
  $region41: #{node_classifier_forward.1} parent=0 // pred_fallthru
    _
  // Predicated region
  $region42: #{node_classifier_forward.1} parent=0 // pred_check
    _
  $region43: #{node_classifier_forward.1} parent=0 // pred_check_branch
    %39 = sbr.rel (0) target = $region45
  $region44: #{node_classifier_forward.1} parent=0 // pred_region
    _
  $region45: #{node_classifier_forward.1} parent=0 // pred_fallthru
    _
  // Predicated region
  $region46: #{node_classifier_forward.1} parent=0 // pred_check
    _
  $region47: #{node_classifier_forward.1} parent=0 // pred_check_branch
    %41 = sbr.rel (0) target = $region49
  $region48: #{node_classifier_forward.1} parent=0 // pred_region
    _
  $region49: #{node_classifier_forward.1} parent=0 // pred_fallthru
    _
  // Predicated region
  $region50: #{node_classifier_forward.1} parent=0 // pred_check
    _
  $region51: #{node_classifier_forward.1} parent=0 // pred_check_branch
    %43 = sbr.rel (0) target = $region53
  $region52: #{node_classifier_forward.1} parent=0 // pred_region
    _
  $region53: #{node_classifier_forward.1} parent=0 // pred_fallthru
    _
  %v45 = vld [vmem:[%s0] sm:$0xff]
  %v46 = vld [vmem:[%s0 + $0x8] sm:$0xff]
  %v47 = vld [vmem:[%s1] sm:$0xf]
  %v48 = vld [vmem:[%s1 + $0x4] sm:$0xf]
  %v49 = vpack.c.bf16 %v46, %v45
  %v50 = vld [vmem:[%s2] sm:$0xf]
  %v51 = vld [vmem:[%s2 + $0x4] sm:$0xf]
  %v52 = vld [vmem:[%s2 + $0x8] sm:$0xf]
  %v53 = vld [vmem:[%s2 + $0xc] sm:$0xf]
  %v54 = vld [vmem:[%s2 + $0x10] sm:$0xf]
  %v55 = vld [vmem:[%s2 + $0x14] sm:$0xf]
  %v56 = vld [vmem:[%s2 + $0x18] sm:$0xf]
  %v57 = vld [vmem:[%s2 + $0x1c] sm:$0xf]
  %v58 = vld [vmem:[%s2 + $0x20] sm:$0xf]
  %v59 = vld [vmem:[%s2 + $0x24] sm:$0xf]
  %v60 = vld [vmem:[%s2 + $0x28] sm:$0xf]
  %v61 = vld [vmem:[%s2 + $0x2c] sm:$0xf]
  %v62 = vld [vmem:[%s2 + $0x30] sm:$0xf]
  %v63 = vld [vmem:[%s2 + $0x34] sm:$0xf]
  %v64 = vld [vmem:[%s2 + $0x38] sm:$0xf]
  %v65 = vld [vmem:[%s2 + $0x3c] sm:$0xf]
  %v82 = vunpack.c.l.b16 %v50
  %v83 = vunpack.c.l.b16 %v51
  %v84 = vunpack.c.l.b16 %v52
  %v85 = vunpack.c.l.b16 %v53
  %v86 = vunpack.c.l.b16 %v54
  %v87 = vunpack.c.l.b16 %v55
  %v88 = vunpack.c.l.b16 %v56
  %v89 = vunpack.c.l.b16 %v57
  %v90 = vunpack.c.l.b16 %v58
  %v91 = vunpack.c.l.b16 %v59
  %v92 = vunpack.c.l.b16 %v60
  %v93 = vunpack.c.l.b16 %v61
  %v94 = vunpack.c.l.b16 %v62
  %v95 = vunpack.c.l.b16 %v63
  %v96 = vunpack.c.l.b16 %v64
  %v97 = vunpack.c.l.b16 %v65
  %v98 = vpack.c.b16 %v83, %v82
  %v99 = vpack.c.b16 %v85, %v84
  %v100 = vpack.c.b16 %v87, %v86
  %v101 = vpack.c.b16 %v89, %v88
  %v102 = vpack.c.b16 %v91, %v90
  %v103 = vpack.c.b16 %v93, %v92
  %v104 = vpack.c.b16 %v95, %v94
  %v105 = vpack.c.b16 %v97, %v96
  %114 = vmatprep.subr.bf16.mxu0 0
  %115 = vmatpush1.bf16.msra.mxu0 %v98
  %116 = vmatprep.subr.bf16.mxu0 0
  %117 = vmatpush1.bf16.msra.mxu0 %v99
  %118 = vmatprep.subr.bf16.mxu0 0
  %119 = vmatpush1.bf16.msra.mxu0 %v100
  %120 = vmatprep.subr.bf16.mxu0 0
  %121 = vmatpush1.bf16.msra.mxu0 %v101
  %122 = vmatprep.subr.bf16.mxu0 0
  %123 = vmatpush1.bf16.msra.mxu0 %v102
  %124 = vmatprep.subr.bf16.mxu0 0
  %125 = vmatpush1.bf16.msra.mxu0 %v103
  %126 = vmatprep.subr.bf16.mxu0 0
  %127 = vmatpush1.bf16.msra.mxu0 %v104
  %128 = vmatprep.subr.bf16.mxu0 0
  %129 = vmatpush1.bf16.msra.mxu0 %v105
  %130 = vmatprep.subr.bf16.mxu0 0
  %131 = vmatpush1.bf16.msra.mxu0 0
  %132 = vmatprep.subr.bf16.mxu0 0
  %133 = vmatpush1.bf16.msra.mxu0 0
  %134 = vmatprep.subr.bf16.mxu0 0
  %135 = vmatpush1.bf16.msra.mxu0 0
  %136 = vmatprep.subr.bf16.mxu0 0
  %137 = vmatpush1.bf16.msra.mxu0 0
  %138 = vmatprep.subr.bf16.mxu0 0
  %139 = vmatpush1.bf16.msra.mxu0 0
  %140 = vmatprep.subr.bf16.mxu0 0
  %141 = vmatpush1.bf16.msra.mxu0 0
  %142 = vmatprep.subr.bf16.mxu0 0
  %143 = vmatpush1.bf16.msra.mxu0 0
  %144 = vmatprep.subr.bf16.mxu0 0
  %145 = vmatpush1.bf16.msra.mxu0 0
  %146 = vmatprep.mubr.bf16.mxu0 0
  %147 = vmatmul.mubr.bf16.gmra.mrb[0].mxu0 %v49
  %v148 = vpop.f32.mrb[0].mxu0
  %v149 = vadd.f32 0.0, %v148
  %v150 = vpop.f32.mrb[0].mxu0
  %v151 = vpop.f32.mrb[0].mxu0
  %v152 = vadd.f32 0.0, %v151
  %v153 = vpop.f32.mrb[0].mxu0
  %154 = vdwg.mxu0
  %v155 = vpack.c.bf16 %v152, %v149
  %v156 = vld [vmem:[%s3] sm:$0x1]
  %v158 = vlaneseq
  %v159 = vshrl.u32 %v158, 7
  %v160 = vsub.s32 0, %v159
  %v161 = vrot.slane %v156, %v160
  %v165 = vunpack.c.l.b16 %v47
  %v166 = vunpack.c.l.b16 %v48
  %v167 = vpack.c.b16 %v166, %v165
  %vm168 = vcmask 130048
  %v170 = vsel %vm168, %v167, 0
  %172 = vmatprep.subr.bf16.mxu0 0
  %173 = vmatpush1.bf16.msra.mxu0 %v155
  %174 = vmatprep.subr.bf16.mxu0 0
  %175 = vmatpush1.bf16.msra.mxu0 0
  %176 = vmatprep.subr.bf16.mxu0 0
  %177 = vmatpush1.bf16.msra.mxu0 0
  %178 = vmatprep.subr.bf16.mxu0 0
  %179 = vmatpush1.bf16.msra.mxu0 0
  %180 = vmatprep.subr.bf16.mxu0 0
  %181 = vmatpush1.bf16.msra.mxu0 0
  %182 = vmatprep.subr.bf16.mxu0 0
  %183 = vmatpush1.bf16.msra.mxu0 0
  %184 = vmatprep.subr.bf16.mxu0 0
  %185 = vmatpush1.bf16.msra.mxu0 0
  %186 = vmatprep.subr.bf16.mxu0 0
  %187 = vmatpush1.bf16.msra.mxu0 0
  %188 = vmatprep.subr.bf16.mxu0 0
  %189 = vmatpush1.bf16.msra.mxu0 0
  %190 = vmatprep.subr.bf16.mxu0 0
  %191 = vmatpush1.bf16.msra.mxu0 0
  %192 = vmatprep.subr.bf16.mxu0 0
  %193 = vmatpush1.bf16.msra.mxu0 0
  %194 = vmatprep.subr.bf16.mxu0 0
  %195 = vmatpush1.bf16.msra.mxu0 0
  %196 = vmatprep.subr.bf16.mxu0 0
  %197 = vmatpush1.bf16.msra.mxu0 0
  %198 = vmatprep.subr.bf16.mxu0 0
  %199 = vmatpush1.bf16.msra.mxu0 0
  %200 = vmatprep.subr.bf16.mxu0 0
  %201 = vmatpush1.bf16.msra.mxu0 0
  %202 = vmatprep.subr.bf16.mxu0 0
  %203 = vmatpush1.bf16.msra.mxu0 0
  %204 = vmatprep.mubr.bf16.mxu0 0
  %205 = vmatmul.mubr.bf16.gmra.mrb[0].mxu0 %v170
  %v206 = vpop.f32.mrb[0].mxu0
  %v207 = vadd.f32 %v161, %v206
  %v208 = vpop.f32.mrb[0].mxu0
  %v209 = vpop.f32.mrb[0].mxu0
  %v210 = vadd.f32 %v161, %v209
  %v211 = vpop.f32.mrb[0].mxu0
  %212 = vdwg.mxu0
  %v213 = vadd.f32 %v207, %v45
  %v214 = vadd.f32 %v210, %v46
  %v215 = vld [vmem:[%s4] sm:$0x1]
  %v216 = vld [vmem:[%s5] sm:$0x1]
  %v217 = vadd.f32 %v213, %v214
  %v218 = vrot.slane %v217, 4
  %v219 = vadd.f32 %v217, %v218
  %v220 = vrot.slane %v219, 2
  %v221 = vadd.f32 %v219, %v220
  %v222 = vrot.slane %v221, 1
  %v223 = vadd.f32 %v221, %v222
  %v224 = vrcp.pop 16.0
  %v225 = vmul.f32 %v223, %v224
  %v226 = vsub.f32 %v213, %v225
  %v227 = vsub.f32 %v214, %v225
  %v228 = vmul.f32 %v226, %v226
  %v229 = vmul.f32 %v227, %v227
  %v230 = vadd.f32 %v228, %v229
  %v231 = vrot.slane %v230, 4
  %v232 = vadd.f32 %v230, %v231
  %v233 = vrot.slane %v232, 2
  %v234 = vadd.f32 %v232, %v233
  %v235 = vrot.slane %v234, 1
  %v236 = vadd.f32 %v234, %v235
  %v237 = vmul.f32 %v236, %v224
  %v238 = vadd.f32 %v237, 1e-05
  %v239 = vrsqrt.pop %v238
  %v240 = vmul.f32 %v239, %v215
  %v241 = vlaneseq
  %v242 = vshrl.u32 %v241, 7
  %v243 = vsub.s32 0, %v242
  %v244 = vrot.slane %v240, %v243
  %v245 = vmul.f32 %v226, %v244
  %v246 = vmul.f32 %v227, %v244
  %v248 = vlaneseq
  %v249 = vshrl.u32 %v248, 7
  %v250 = vsub.s32 0, %v249
  %v251 = vrot.slane %v216, %v250
  %v253 = vadd.f32 %v245, %v251
  %v254 = vadd.f32 %v246, %v251
  %v255 = vpack.c.bf16 %v254, %v253
  %v256 = vld [vmem:[%s6] sm:$0xf]
  %v257 = vld [vmem:[%s6 + $0x4] sm:$0xf]
  %v258 = vld [vmem:[%s6 + $0x8] sm:$0xf]
  %v259 = vld [vmem:[%s6 + $0xc] sm:$0xf]
  %v260 = vld [vmem:[%s6 + $0x10] sm:$0xf]
  %v261 = vld [vmem:[%s6 + $0x14] sm:$0xf]
  %v262 = vld [vmem:[%s6 + $0x18] sm:$0xf]
  %v263 = vld [vmem:[%s6 + $0x1c] sm:$0xf]
  %v264 = vld [vmem:[%s6 + $0x20] sm:$0xf]
  %v265 = vld [vmem:[%s6 + $0x24] sm:$0xf]
  %v266 = vld [vmem:[%s6 + $0x28] sm:$0xf]
  %v267 = vld [vmem:[%s6 + $0x2c] sm:$0xf]
  %v268 = vld [vmem:[%s6 + $0x30] sm:$0xf]
  %v269 = vld [vmem:[%s6 + $0x34] sm:$0xf]
  %v270 = vld [vmem:[%s6 + $0x38] sm:$0xf]
  %v271 = vld [vmem:[%s6 + $0x3c] sm:$0xf]
  %v272 = vld [vmem:[%s7] sm:$0x1]
  %v274 = vlaneseq
  %v275 = vshrl.u32 %v274, 7
  %v276 = vsub.s32 0, %v275
  %v277 = vrot.slane %v272, %v276
  %v295 = vunpack.c.l.b16 %v256
  %v296 = vunpack.c.l.b16 %v257
  %v297 = vunpack.c.l.b16 %v258
  %v298 = vunpack.c.l.b16 %v259
  %v299 = vunpack.c.l.b16 %v260
  %v300 = vunpack.c.l.b16 %v261
  %v301 = vunpack.c.l.b16 %v262
  %v302 = vunpack.c.l.b16 %v263
  %v303 = vunpack.c.l.b16 %v264
  %v304 = vunpack.c.l.b16 %v265
  %v305 = vunpack.c.l.b16 %v266
  %v306 = vunpack.c.l.b16 %v267
  %v307 = vunpack.c.l.b16 %v268
  %v308 = vunpack.c.l.b16 %v269
  %v309 = vunpack.c.l.b16 %v270
  %v310 = vunpack.c.l.b16 %v271
  %v311 = vpack.c.b16 %v296, %v295
  %v312 = vpack.c.b16 %v298, %v297
  %v313 = vpack.c.b16 %v300, %v299
  %v314 = vpack.c.b16 %v302, %v301
  %v315 = vpack.c.b16 %v304, %v303
  %v316 = vpack.c.b16 %v306, %v305
  %v317 = vpack.c.b16 %v308, %v307
  %v318 = vpack.c.b16 %v310, %v309
  %327 = vmatprep.subr.bf16.mxu0 0
  %328 = vmatpush1.bf16.msra.mxu0 %v311
  %329 = vmatprep.subr.bf16.mxu0 0
  %330 = vmatpush1.bf16.msra.mxu0 %v312
  %331 = vmatprep.subr.bf16.mxu0 0
  %332 = vmatpush1.bf16.msra.mxu0 %v313
  %333 = vmatprep.subr.bf16.mxu0 0
  %334 = vmatpush1.bf16.msra.mxu0 %v314
  %335 = vmatprep.subr.bf16.mxu0 0
  %336 = vmatpush1.bf16.msra.mxu0 %v315
  %337 = vmatprep.subr.bf16.mxu0 0
  %338 = vmatpush1.bf16.msra.mxu0 %v316
  %339 = vmatprep.subr.bf16.mxu0 0
  %340 = vmatpush1.bf16.msra.mxu0 %v317
  %341 = vmatprep.subr.bf16.mxu0 0
  %342 = vmatpush1.bf16.msra.mxu0 %v318
  %343 = vmatprep.subr.bf16.mxu0 0
  %344 = vmatpush1.bf16.msra.mxu0 0
  %345 = vmatprep.subr.bf16.mxu0 0
  %346 = vmatpush1.bf16.msra.mxu0 0
  %347 = vmatprep.subr.bf16.mxu0 0
  %348 = vmatpush1.bf16.msra.mxu0 0
  %349 = vmatprep.subr.bf16.mxu0 0
  %350 = vmatpush1.bf16.msra.mxu0 0
  %351 = vmatprep.subr.bf16.mxu0 0
  %352 = vmatpush1.bf16.msra.mxu0 0
  %353 = vmatprep.subr.bf16.mxu0 0
  %354 = vmatpush1.bf16.msra.mxu0 0
  %355 = vmatprep.subr.bf16.mxu0 0
  %356 = vmatpush1.bf16.msra.mxu0 0
  %357 = vmatprep.subr.bf16.mxu0 0
  %358 = vmatpush1.bf16.msra.mxu0 0
  %359 = vmatprep.mubr.bf16.mxu0 0
  %360 = vmatmul.mubr.bf16.gmra.mrb[0].mxu0 %v255
  %v361 = vpop.f32.mrb[0].mxu0
  %v362 = vadd.f32 %v277, %v361
  %v363 = vpop.f32.mrb[0].mxu0
  %v364 = vpop.f32.mrb[0].mxu0
  %v365 = vadd.f32 %v277, %v364
  %v366 = vpop.f32.mrb[0].mxu0
  %367 = vdwg.mxu0
  %v368 = vmax.f32 %v362, 0.0
  %v369 = vmax.f32 %v365, 0.0
  %v370 = vpack.c.bf16 %v369, %v368
  %v371 = vld [vmem:[%s8] sm:$0xf]
  %v372 = vld [vmem:[%s8 + $0x4] sm:$0xf]
  %v373 = vld [vmem:[%s8 + $0x8] sm:$0xf]
  %v374 = vld [vmem:[%s8 + $0xc] sm:$0xf]
  %v375 = vld [vmem:[%s8 + $0x10] sm:$0xf]
  %v376 = vld [vmem:[%s8 + $0x14] sm:$0xf]
  %v377 = vld [vmem:[%s8 + $0x18] sm:$0xf]
  %v378 = vld [vmem:[%s8 + $0x1c] sm:$0xf]
  %v379 = vld [vmem:[%s8 + $0x20] sm:$0xf]
  %v380 = vld [vmem:[%s8 + $0x24] sm:$0xf]
  %v381 = vld [vmem:[%s8 + $0x28] sm:$0xf]
  %v382 = vld [vmem:[%s8 + $0x2c] sm:$0xf]
  %v383 = vld [vmem:[%s8 + $0x30] sm:$0xf]
  %v384 = vld [vmem:[%s8 + $0x34] sm:$0xf]
  %v385 = vld [vmem:[%s8 + $0x38] sm:$0xf]
  %v386 = vld [vmem:[%s8 + $0x3c] sm:$0xf]
  %v403 = vunpack.c.l.b16 %v371
  %v404 = vunpack.c.l.b16 %v372
  %v405 = vunpack.c.l.b16 %v373
  %v406 = vunpack.c.l.b16 %v374
  %v407 = vunpack.c.l.b16 %v375
  %v408 = vunpack.c.l.b16 %v376
  %v409 = vunpack.c.l.b16 %v377
  %v410 = vunpack.c.l.b16 %v378
  %v411 = vunpack.c.l.b16 %v379
  %v412 = vunpack.c.l.b16 %v380
  %v413 = vunpack.c.l.b16 %v381
  %v414 = vunpack.c.l.b16 %v382
  %v415 = vunpack.c.l.b16 %v383
  %v416 = vunpack.c.l.b16 %v384
  %v417 = vunpack.c.l.b16 %v385
  %v418 = vunpack.c.l.b16 %v386
  %v419 = vpack.c.b16 %v404, %v403
  %v420 = vpack.c.b16 %v406, %v405
  %v421 = vpack.c.b16 %v408, %v407
  %v422 = vpack.c.b16 %v410, %v409
  %v423 = vpack.c.b16 %v412, %v411
  %v424 = vpack.c.b16 %v414, %v413
  %v425 = vpack.c.b16 %v416, %v415
  %v426 = vpack.c.b16 %v418, %v417
  %435 = vmatprep.subr.bf16.mxu0 0
  %436 = vmatpush1.bf16.msra.mxu0 %v419
  %437 = vmatprep.subr.bf16.mxu0 0
  %438 = vmatpush1.bf16.msra.mxu0 %v420
  %439 = vmatprep.subr.bf16.mxu0 0
  %440 = vmatpush1.bf16.msra.mxu0 %v421
  %441 = vmatprep.subr.bf16.mxu0 0
  %442 = vmatpush1.bf16.msra.mxu0 %v422
  %443 = vmatprep.subr.bf16.mxu0 0
  %444 = vmatpush1.bf16.msra.mxu0 %v423
  %445 = vmatprep.subr.bf16.mxu0 0
  %446 = vmatpush1.bf16.msra.mxu0 %v424
  %447 = vmatprep.subr.bf16.mxu0 0
  %448 = vmatpush1.bf16.msra.mxu0 %v425
  %449 = vmatprep.subr.bf16.mxu0 0
  %450 = vmatpush1.bf16.msra.mxu0 %v426
  %451 = vmatprep.subr.bf16.mxu0 0
  %452 = vmatpush1.bf16.msra.mxu0 0
  %453 = vmatprep.subr.bf16.mxu0 0
  %454 = vmatpush1.bf16.msra.mxu0 0
  %455 = vmatprep.subr.bf16.mxu0 0
  %456 = vmatpush1.bf16.msra.mxu0 0
  %457 = vmatprep.subr.bf16.mxu0 0
  %458 = vmatpush1.bf16.msra.mxu0 0
  %459 = vmatprep.subr.bf16.mxu0 0
  %460 = vmatpush1.bf16.msra.mxu0 0
  %461 = vmatprep.subr.bf16.mxu0 0
  %462 = vmatpush1.bf16.msra.mxu0 0
  %463 = vmatprep.subr.bf16.mxu0 0
  %464 = vmatpush1.bf16.msra.mxu0 0
  %465 = vmatprep.subr.bf16.mxu0 0
  %466 = vmatpush1.bf16.msra.mxu0 0
  %467 = vmatprep.mubr.bf16.mxu0 0
  %468 = vmatmul.mubr.bf16.gmra.mrb[0].mxu0 %v370
  %v469 = vpop.f32.mrb[0].mxu0
  %v470 = vadd.f32 %v253, %v469
  %v471 = vpop.f32.mrb[0].mxu0
  %v472 = vpop.f32.mrb[0].mxu0
  %v473 = vadd.f32 %v254, %v472
  %v474 = vpop.f32.mrb[0].mxu0
  %475 = vdwg.mxu0
  %v476 = vld [vmem:[%s9] sm:$0x1]
  %v477 = vld [vmem:[%s10] sm:$0x1]
  %v478 = vadd.f32 %v470, %v473
  %v479 = vrot.slane %v478, 4
  %v480 = vadd.f32 %v478, %v479
  %v481 = vrot.slane %v480, 2
  %v482 = vadd.f32 %v480, %v481
  %v483 = vrot.slane %v482, 1
  %v484 = vadd.f32 %v482, %v483
  %v485 = vmul.f32 %v484, %v224
  %v486 = vsub.f32 %v470, %v485
  %v487 = vsub.f32 %v473, %v485
  %v488 = vmul.f32 %v486, %v486
  %v489 = vmul.f32 %v487, %v487
  %v490 = vadd.f32 %v488, %v489
  %v491 = vrot.slane %v490, 4
  %v492 = vadd.f32 %v490, %v491
  %v493 = vrot.slane %v492, 2
  %v494 = vadd.f32 %v492, %v493
  %v495 = vrot.slane %v494, 1
  %v496 = vadd.f32 %v494, %v495
  %v497 = vmul.f32 %v496, %v224
  %v498 = vadd.f32 %v497, 1e-05
  %v499 = vrsqrt.pop %v498
  %v500 = vmul.f32 %v499, %v476
  %v501 = vlaneseq
  %v502 = vshrl.u32 %v501, 7
  %v503 = vsub.s32 0, %v502
  %v504 = vrot.slane %v500, %v503
  %v505 = vmul.f32 %v486, %v504
  %v506 = vmul.f32 %v487, %v504
  %v508 = vlaneseq
  %v509 = vshrl.u32 %v508, 7
  %v510 = vsub.s32 0, %v509
  %v511 = vrot.slane %v477, %v510
  %v513 = vadd.f32 %v505, %v511
  %v514 = vadd.f32 %v506, %v511
  %v515 = vpack.c.bf16 %v514, %v513
  %s516 = scalar_lea.vmem %s2, 64
  %v517 = vld [vmem:[%s516] sm:$0xf]
  %v518 = vld [vmem:[%s516 + $0x4] sm:$0xf]
  %v519 = vld [vmem:[%s516 + $0x8] sm:$0xf]
  %v520 = vld [vmem:[%s516 + $0xc] sm:$0xf]
  %v521 = vld [vmem:[%s516 + $0x10] sm:$0xf]
  %v522 = vld [vmem:[%s516 + $0x14] sm:$0xf]
  %v523 = vld [vmem:[%s516 + $0x18] sm:$0xf]
  %v524 = vld [vmem:[%s516 + $0x1c] sm:$0xf]
  %v525 = vld [vmem:[%s516 + $0x20] sm:$0xf]
  %v526 = vld [vmem:[%s516 + $0x24] sm:$0xf]
  %v527 = vld [vmem:[%s516 + $0x28] sm:$0xf]
  %v528 = vld [vmem:[%s516 + $0x2c] sm:$0xf]
  %v529 = vld [vmem:[%s516 + $0x30] sm:$0xf]
  %v530 = vld [vmem:[%s516 + $0x34] sm:$0xf]
  %v531 = vld [vmem:[%s516 + $0x38] sm:$0xf]
  %v532 = vld [vmem:[%s516 + $0x3c] sm:$0xf]
  %v549 = vunpack.c.l.b16 %v517
  %v550 = vunpack.c.l.b16 %v518
  %v551 = vunpack.c.l.b16 %v519
  %v552 = vunpack.c.l.b16 %v520
  %v553 = vunpack.c.l.b16 %v521
  %v554 = vunpack.c.l.b16 %v522
  %v555 = vunpack.c.l.b16 %v523
  %v556 = vunpack.c.l.b16 %v524
  %v557 = vunpack.c.l.b16 %v525
  %v558 = vunpack.c.l.b16 %v526
  %v559 = vunpack.c.l.b16 %v527
  %v560 = vunpack.c.l.b16 %v528
  %v561 = vunpack.c.l.b16 %v529
  %v562 = vunpack.c.l.b16 %v530
  %v563 = vunpack.c.l.b16 %v531
  %v564 = vunpack.c.l.b16 %v532
  %v565 = vpack.c.b16 %v550, %v549
  %v566 = vpack.c.b16 %v552, %v551
  %v567 = vpack.c.b16 %v554, %v553
  %v568 = vpack.c.b16 %v556, %v555
  %v569 = vpack.c.b16 %v558, %v557
  %v570 = vpack.c.b16 %v560, %v559
  %v571 = vpack.c.b16 %v562, %v561
  %v572 = vpack.c.b16 %v564, %v563
  %581 = vmatprep.subr.bf16.mxu0 0
  %582 = vmatpush1.bf16.msra.mxu0 %v565
  %583 = vmatprep.subr.bf16.mxu0 0
  %584 = vmatpush1.bf16.msra.mxu0 %v566
  %585 = vmatprep.subr.bf16.mxu0 0
  %586 = vmatpush1.bf16.msra.mxu0 %v567
  %587 = vmatprep.subr.bf16.mxu0 0
  %588 = vmatpush1.bf16.msra.mxu0 %v568
  %589 = vmatprep.subr.bf16.mxu0 0
  %590 = vmatpush1.bf16.msra.mxu0 %v569
  %591 = vmatprep.subr.bf16.mxu0 0
  %592 = vmatpush1.bf16.msra.mxu0 %v570
  %593 = vmatprep.subr.bf16.mxu0 0
  %594 = vmatpush1.bf16.msra.mxu0 %v571
  %595 = vmatprep.subr.bf16.mxu0 0
  %596 = vmatpush1.bf16.msra.mxu0 %v572
  %597 = vmatprep.subr.bf16.mxu0 0
  %598 = vmatpush1.bf16.msra.mxu0 0
  %599 = vmatprep.subr.bf16.mxu0 0
  %600 = vmatpush1.bf16.msra.mxu0 0
  %601 = vmatprep.subr.bf16.mxu0 0
  %602 = vmatpush1.bf16.msra.mxu0 0
  %603 = vmatprep.subr.bf16.mxu0 0
  %604 = vmatpush1.bf16.msra.mxu0 0
  %605 = vmatprep.subr.bf16.mxu0 0
  %606 = vmatpush1.bf16.msra.mxu0 0
  %607 = vmatprep.subr.bf16.mxu0 0
  %608 = vmatpush1.bf16.msra.mxu0 0
  %609 = vmatprep.subr.bf16.mxu0 0
  %610 = vmatpush1.bf16.msra.mxu0 0
  %611 = vmatprep.subr.bf16.mxu0 0
  %612 = vmatpush1.bf16.msra.mxu0 0
  %613 = vmatprep.mubr.bf16.mxu0 0
  %614 = vmatmul.mubr.bf16.gmra.mrb[0].mxu0 %v515
  %v615 = vpop.f32.mrb[0].mxu0
  %v616 = vadd.f32 0.0, %v615
  %v617 = vpop.f32.mrb[0].mxu0
  %v618 = vpop.f32.mrb[0].mxu0
  %v619 = vadd.f32 0.0, %v618
  %v620 = vpop.f32.mrb[0].mxu0
  %621 = vdwg.mxu0
  %v622 = vpack.c.bf16 %v619, %v616
  %s623 = scalar_lea.vmem %s3, 1
  %v624 = vld [vmem:[%s623] sm:$0x1]
  %v626 = vlaneseq
  %v627 = vshrl.u32 %v626, 7
  %v628 = vsub.s32 0, %v627
  %v629 = vrot.slane %v624, %v628
  %631 = vmatprep.subr.bf16.mxu0 0
  %632 = vmatpush1.bf16.msra.mxu0 %v622
  %633 = vmatprep.subr.bf16.mxu0 0
  %634 = vmatpush1.bf16.msra.mxu0 0
  %635 = vmatprep.subr.bf16.mxu0 0
  %636 = vmatpush1.bf16.msra.mxu0 0
  %637 = vmatprep.subr.bf16.mxu0 0
  %638 = vmatpush1.bf16.msra.mxu0 0
  %639 = vmatprep.subr.bf16.mxu0 0
  %640 = vmatpush1.bf16.msra.mxu0 0
  %641 = vmatprep.subr.bf16.mxu0 0
  %642 = vmatpush1.bf16.msra.mxu0 0
  %643 = vmatprep.subr.bf16.mxu0 0
  %644 = vmatpush1.bf16.msra.mxu0 0
  %645 = vmatprep.subr.bf16.mxu0 0
  %646 = vmatpush1.bf16.msra.mxu0 0
  %647 = vmatprep.subr.bf16.mxu0 0
  %648 = vmatpush1.bf16.msra.mxu0 0
  %649 = vmatprep.subr.bf16.mxu0 0
  %650 = vmatpush1.bf16.msra.mxu0 0
  %651 = vmatprep.subr.bf16.mxu0 0
  %652 = vmatpush1.bf16.msra.mxu0 0
  %653 = vmatprep.subr.bf16.mxu0 0
  %654 = vmatpush1.bf16.msra.mxu0 0
  %655 = vmatprep.subr.bf16.mxu0 0
  %656 = vmatpush1.bf16.msra.mxu0 0
  %657 = vmatprep.subr.bf16.mxu0 0
  %658 = vmatpush1.bf16.msra.mxu0 0
  %659 = vmatprep.subr.bf16.mxu0 0
  %660 = vmatpush1.bf16.msra.mxu0 0
  %661 = vmatprep.subr.bf16.mxu0 0
  %662 = vmatpush1.bf16.msra.mxu0 0
  %663 = vmatprep.mubr.bf16.mxu0 0
  %664 = vmatmul.mubr.bf16.gmra.mrb[0].mxu0 %v170
  %v665 = vpop.f32.mrb[0].mxu0
  %v666 = vadd.f32 %v629, %v665
  %v667 = vpop.f32.mrb[0].mxu0
  %v668 = vpop.f32.mrb[0].mxu0
  %v669 = vadd.f32 %v629, %v668
  %v670 = vpop.f32.mrb[0].mxu0
  %671 = vdwg.mxu0
  %v672 = vadd.f32 %v666, %v513
  %v673 = vadd.f32 %v669, %v514
  %s674 = scalar_lea.vmem %s4, 1
  %v675 = vld [vmem:[%s674] sm:$0x1]
  %s676 = scalar_lea.vmem %s5, 1
  %v677 = vld [vmem:[%s676] sm:$0x1]
  %v678 = vadd.f32 %v672, %v673
  %v679 = vrot.slane %v678, 4
  %v680 = vadd.f32 %v678, %v679
  %v681 = vrot.slane %v680, 2
  %v682 = vadd.f32 %v680, %v681
  %v683 = vrot.slane %v682, 1
  %v684 = vadd.f32 %v682, %v683
  %v685 = vmul.f32 %v684, %v224
  %v686 = vsub.f32 %v672, %v685
  %v687 = vsub.f32 %v673, %v685
  %v688 = vmul.f32 %v686, %v686
  %v689 = vmul.f32 %v687, %v687
  %v690 = vadd.f32 %v688, %v689
  %v691 = vrot.slane %v690, 4
  %v692 = vadd.f32 %v690, %v691
  %v693 = vrot.slane %v692, 2
  %v694 = vadd.f32 %v692, %v693
  %v695 = vrot.slane %v694, 1
  %v696 = vadd.f32 %v694, %v695
  %v697 = vmul.f32 %v696, %v224
  %v698 = vadd.f32 %v697, 1e-05
  %v699 = vrsqrt.pop %v698
  %v700 = vmul.f32 %v699, %v675
  %v701 = vlaneseq
  %v702 = vshrl.u32 %v701, 7
  %v703 = vsub.s32 0, %v702
  %v704 = vrot.slane %v700, %v703
  %v705 = vmul.f32 %v686, %v704
  %v706 = vmul.f32 %v687, %v704
  %v708 = vlaneseq
  %v709 = vshrl.u32 %v708, 7
  %v710 = vsub.s32 0, %v709
  %v711 = vrot.slane %v677, %v710
  %v713 = vadd.f32 %v705, %v711
  %v714 = vadd.f32 %v706, %v711
  %v715 = vpack.c.bf16 %v714, %v713
  %s716 = scalar_lea.vmem %s6, 64
  %v717 = vld [vmem:[%s716] sm:$0xf]
  %v718 = vld [vmem:[%s716 + $0x4] sm:$0xf]
  %v719 = vld [vmem:[%s716 + $0x8] sm:$0xf]
  %v720 = vld [vmem:[%s716 + $0xc] sm:$0xf]
  %v721 = vld [vmem:[%s716 + $0x10] sm:$0xf]
  %v722 = vld [vmem:[%s716 + $0x14] sm:$0xf]
  %v723 = vld [vmem:[%s716 + $0x18] sm:$0xf]
  %v724 = vld [vmem:[%s716 + $0x1c] sm:$0xf]
  %v725 = vld [vmem:[%s716 + $0x20] sm:$0xf]
  %v726 = vld [vmem:[%s716 + $0x24] sm:$0xf]
  %v727 = vld [vmem:[%s716 + $0x28] sm:$0xf]
  %v728 = vld [vmem:[%s716 + $0x2c] sm:$0xf]
  %v729 = vld [vmem:[%s716 + $0x30] sm:$0xf]
  %v730 = vld [vmem:[%s716 + $0x34] sm:$0xf]
  %v731 = vld [vmem:[%s716 + $0x38] sm:$0xf]
  %v732 = vld [vmem:[%s716 + $0x3c] sm:$0xf]
  %s733 = scalar_lea.vmem %s7, 1
  %v734 = vld [vmem:[%s733] sm:$0x1]
  %v736 = vlaneseq
  %v737 = vshrl.u32 %v736, 7
  %v738 = vsub.s32 0, %v737
  %v739 = vrot.slane %v734, %v738
  %v757 = vunpack.c.l.b16 %v717
  %v758 = vunpack.c.l.b16 %v718
  %v759 = vunpack.c.l.b16 %v719
  %v760 = vunpack.c.l.b16 %v720
  %v761 = vunpack.c.l.b16 %v721
  %v762 = vunpack.c.l.b16 %v722
  %v763 = vunpack.c.l.b16 %v723
  %v764 = vunpack.c.l.b16 %v724
  %v765 = vunpack.c.l.b16 %v725
  %v766 = vunpack.c.l.b16 %v726
  %v767 = vunpack.c.l.b16 %v727
  %v768 = vunpack.c.l.b16 %v728
  %v769 = vunpack.c.l.b16 %v729
  %v770 = vunpack.c.l.b16 %v730
  %v771 = vunpack.c.l.b16 %v731
  %v772 = vunpack.c.l.b16 %v732
  %v773 = vpack.c.b16 %v758, %v757
  %v774 = vpack.c.b16 %v760, %v759
  %v775 = vpack.c.b16 %v762, %v761
  %v776 = vpack.c.b16 %v764, %v763
  %v777 = vpack.c.b16 %v766, %v765
  %v778 = vpack.c.b16 %v768, %v767
  %v779 = vpack.c.b16 %v770, %v769
  %v780 = vpack.c.b16 %v772, %v771
  %789 = vmatprep.subr.bf16.mxu0 0
  %790 = vmatpush1.bf16.msra.mxu0 %v773
  %791 = vmatprep.subr.bf16.mxu0 0
  %792 = vmatpush1.bf16.msra.mxu0 %v774
  %793 = vmatprep.subr.bf16.mxu0 0
  %794 = vmatpush1.bf16.msra.mxu0 %v775
  %795 = vmatprep.subr.bf16.mxu0 0
  %796 = vmatpush1.bf16.msra.mxu0 %v776
  %797 = vmatprep.subr.bf16.mxu0 0
  %798 = vmatpush1.bf16.msra.mxu0 %v777
  %799 = vmatprep.subr.bf16.mxu0 0
  %800 = vmatpush1.bf16.msra.mxu0 %v778
  %801 = vmatprep.subr.bf16.mxu0 0
  %802 = vmatpush1.bf16.msra.mxu0 %v779
  %803 = vmatprep.subr.bf16.mxu0 0
  %804 = vmatpush1.bf16.msra.mxu0 %v780
  %805 = vmatprep.subr.bf16.mxu0 0
  %806 = vmatpush1.bf16.msra.mxu0 0
  %807 = vmatprep.subr.bf16.mxu0 0
  %808 = vmatpush1.bf16.msra.mxu0 0
  %809 = vmatprep.subr.bf16.mxu0 0
  %810 = vmatpush1.bf16.msra.mxu0 0
  %811 = vmatprep.subr.bf16.mxu0 0
  %812 = vmatpush1.bf16.msra.mxu0 0
  %813 = vmatprep.subr.bf16.mxu0 0
  %814 = vmatpush1.bf16.msra.mxu0 0
  %815 = vmatprep.subr.bf16.mxu0 0
  %816 = vmatpush1.bf16.msra.mxu0 0
  %817 = vmatprep.subr.bf16.mxu0 0
  %818 = vmatpush1.bf16.msra.mxu0 0
  %819 = vmatprep.subr.bf16.mxu0 0
  %820 = vmatpush1.bf16.msra.mxu0 0
  %821 = vmatprep.mubr.bf16.mxu0 0
  %822 = vmatmul.mubr.bf16.gmra.mrb[0].mxu0 %v715
  %v823 = vpop.f32.mrb[0].mxu0
  %v824 = vadd.f32 %v739, %v823
  %v825 = vpop.f32.mrb[0].mxu0
  %v826 = vpop.f32.mrb[0].mxu0
  %v827 = vadd.f32 %v739, %v826
  %v828 = vpop.f32.mrb[0].mxu0
  %829 = vdwg.mxu0
  %v830 = vmax.f32 %v824, 0.0
  %v831 = vmax.f32 %v827, 0.0
  %v832 = vpack.c.bf16 %v831, %v830
  %s833 = scalar_lea.vmem %s8, 64
  %v834 = vld [vmem:[%s833] sm:$0xf]
  %v835 = vld [vmem:[%s833 + $0x4] sm:$0xf]
  %v836 = vld [vmem:[%s833 + $0x8] sm:$0xf]
  %v837 = vld [vmem:[%s833 + $0xc] sm:$0xf]
  %v838 = vld [vmem:[%s833 + $0x10] sm:$0xf]
  %v839 = vld [vmem:[%s833 + $0x14] sm:$0xf]
  %v840 = vld [vmem:[%s833 + $0x18] sm:$0xf]
  %v841 = vld [vmem:[%s833 + $0x1c] sm:$0xf]
  %v842 = vld [vmem:[%s833 + $0x20] sm:$0xf]
  %v843 = vld [vmem:[%s833 + $0x24] sm:$0xf]
  %v844 = vld [vmem:[%s833 + $0x28] sm:$0xf]
  %v845 = vld [vmem:[%s833 + $0x2c] sm:$0xf]
  %v846 = vld [vmem:[%s833 + $0x30] sm:$0xf]
  %v847 = vld [vmem:[%s833 + $0x34] sm:$0xf]
  %v848 = vld [vmem:[%s833 + $0x38] sm:$0xf]
  %v849 = vld [vmem:[%s833 + $0x3c] sm:$0xf]
  %v866 = vunpack.c.l.b16 %v834
  %v867 = vunpack.c.l.b16 %v835
  %v868 = vunpack.c.l.b16 %v836
  %v869 = vunpack.c.l.b16 %v837
  %v870 = vunpack.c.l.b16 %v838
  %v871 = vunpack.c.l.b16 %v839
  %v872 = vunpack.c.l.b16 %v840
  %v873 = vunpack.c.l.b16 %v841
  %v874 = vunpack.c.l.b16 %v842
  %v875 = vunpack.c.l.b16 %v843
  %v876 = vunpack.c.l.b16 %v844
  %v877 = vunpack.c.l.b16 %v845
  %v878 = vunpack.c.l.b16 %v846
  %v879 = vunpack.c.l.b16 %v847
  %v880 = vunpack.c.l.b16 %v848
  %v881 = vunpack.c.l.b16 %v849
  %v882 = vpack.c.b16 %v867, %v866
  %v883 = vpack.c.b16 %v869, %v868
  %v884 = vpack.c.b16 %v871, %v870
  %v885 = vpack.c.b16 %v873, %v872
  %v886 = vpack.c.b16 %v875, %v874
  %v887 = vpack.c.b16 %v877, %v876
  %v888 = vpack.c.b16 %v879, %v878
  %v889 = vpack.c.b16 %v881, %v880
  %898 = vmatprep.subr.bf16.mxu0 0
  %899 = vmatpush1.bf16.msra.mxu0 %v882
  %900 = vmatprep.subr.bf16.mxu0 0
  %901 = vmatpush1.bf16.msra.mxu0 %v883
  %902 = vmatprep.subr.bf16.mxu0 0
  %903 = vmatpush1.bf16.msra.mxu0 %v884
  %904 = vmatprep.subr.bf16.mxu0 0
  %905 = vmatpush1.bf16.msra.mxu0 %v885
  %906 = vmatprep.subr.bf16.mxu0 0
  %907 = vmatpush1.bf16.msra.mxu0 %v886
  %908 = vmatprep.subr.bf16.mxu0 0
  %909 = vmatpush1.bf16.msra.mxu0 %v887
  %910 = vmatprep.subr.bf16.mxu0 0
  %911 = vmatpush1.bf16.msra.mxu0 %v888
  %912 = vmatprep.subr.bf16.mxu0 0
  %913 = vmatpush1.bf16.msra.mxu0 %v889
  %914 = vmatprep.subr.bf16.mxu0 0
  %915 = vmatpush1.bf16.msra.mxu0 0
  %916 = vmatprep.subr.bf16.mxu0 0
  %917 = vmatpush1.bf16.msra.mxu0 0
  %918 = vmatprep.subr.bf16.mxu0 0
  %919 = vmatpush1.bf16.msra.mxu0 0
  %920 = vmatprep.subr.bf16.mxu0 0
  %921 = vmatpush1.bf16.msra.mxu0 0
  %922 = vmatprep.subr.bf16.mxu0 0
  %923 = vmatpush1.bf16.msra.mxu0 0
  %924 = vmatprep.subr.bf16.mxu0 0
  %925 = vmatpush1.bf16.msra.mxu0 0
  %926 = vmatprep.subr.bf16.mxu0 0
  %927 = vmatpush1.bf16.msra.mxu0 0
  %928 = vmatprep.subr.bf16.mxu0 0
  %929 = vmatpush1.bf16.msra.mxu0 0
  %930 = vmatprep.mubr.bf16.mxu0 0
  %931 = vmatmul.mubr.bf16.gmra.mrb[0].mxu0 %v832
  %v932 = vpop.f32.mrb[0].mxu0
  %v933 = vadd.f32 %v713, %v932
  %v934 = vpop.f32.mrb[0].mxu0
  %v935 = vpop.f32.mrb[0].mxu0
  %v936 = vadd.f32 %v714, %v935
  %v937 = vpop.f32.mrb[0].mxu0
  %938 = vdwg.mxu0
  %s939 = scalar_lea.vmem %s9, 1
  %v940 = vld [vmem:[%s939] sm:$0x1]
  %s941 = scalar_lea.vmem %s10, 1
  %v942 = vld [vmem:[%s941] sm:$0x1]
  %v943 = vadd.f32 %v933, %v936
  %v944 = vrot.slane %v943, 4
  %v945 = vadd.f32 %v943, %v944
  %v946 = vrot.slane %v945, 2
  %v947 = vadd.f32 %v945, %v946
  %v948 = vrot.slane %v947, 1
  %v949 = vadd.f32 %v947, %v948
  %v950 = vmul.f32 %v949, %v224
  %v951 = vsub.f32 %v933, %v950
  %v952 = vsub.f32 %v936, %v950
  %v953 = vmul.f32 %v951, %v951
  %v954 = vmul.f32 %v952, %v952
  %v955 = vadd.f32 %v953, %v954
  %v956 = vrot.slane %v955, 4
  %v957 = vadd.f32 %v955, %v956
  %v958 = vrot.slane %v957, 2
  %v959 = vadd.f32 %v957, %v958
  %v960 = vrot.slane %v959, 1
  %v961 = vadd.f32 %v959, %v960
  %v962 = vmul.f32 %v961, %v224
  %v963 = vadd.f32 %v962, 1e-05
  %v964 = vrsqrt.pop %v963
  %v965 = vmul.f32 %v964, %v940
  %v966 = vlaneseq
  %v967 = vshrl.u32 %v966, 7
  %v968 = vsub.s32 0, %v967
  %v969 = vrot.slane %v965, %v968
  %v970 = vmul.f32 %v951, %v969
  %v971 = vmul.f32 %v952, %v969
  %v973 = vlaneseq
  %v974 = vshrl.u32 %v973, 7
  %v975 = vsub.s32 0, %v974
  %v976 = vrot.slane %v942, %v975
  %v978 = vadd.f32 %v970, %v976
  %v979 = vadd.f32 %v971, %v976
  %v980 = vpack.c.bf16 %v979, %v978
  %v981 = vld [vmem:[%s11] sm:$0xf]
  %v982 = vld [vmem:[%s11 + $0x4] sm:$0xf]
  %v983 = vld [vmem:[%s11 + $0x8] sm:$0xf]
  %v984 = vld [vmem:[%s11 + $0xc] sm:$0xf]
  %v985 = vld [vmem:[%s11 + $0x10] sm:$0xf]
  %v986 = vld [vmem:[%s11 + $0x14] sm:$0xf]
  %v987 = vld [vmem:[%s11 + $0x18] sm:$0xf]
  %v988 = vld [vmem:[%s11 + $0x1c] sm:$0xf]
  %v989 = vld [vmem:[%s11 + $0x20] sm:$0xf]
  %v990 = vld [vmem:[%s11 + $0x24] sm:$0xf]
  %v991 = vld [vmem:[%s11 + $0x28] sm:$0xf]
  %v992 = vld [vmem:[%s11 + $0x2c] sm:$0xf]
  %v993 = vld [vmem:[%s11 + $0x30] sm:$0xf]
  %v994 = vld [vmem:[%s11 + $0x34] sm:$0xf]
  %v995 = vld [vmem:[%s11 + $0x38] sm:$0xf]
  %v996 = vld [vmem:[%s11 + $0x3c] sm:$0xf]
  %v997 = vld [vmem:[%s12] sm:$0x1]
  %v999 = vlaneseq
  %v1000 = vshrl.u32 %v999, 7
  %v1001 = vsub.s32 0, %v1000
  %v1002 = vrot.slane %v997, %v1001
  %v1020 = vunpack.c.l.b16 %v981
  %v1021 = vunpack.c.l.b16 %v982
  %v1022 = vunpack.c.l.b16 %v983
  %v1023 = vunpack.c.l.b16 %v984
  %v1024 = vunpack.c.l.b16 %v985
  %v1025 = vunpack.c.l.b16 %v986
  %v1026 = vunpack.c.l.b16 %v987
  %v1027 = vunpack.c.l.b16 %v988
  %v1028 = vunpack.c.l.b16 %v989
  %v1029 = vunpack.c.l.b16 %v990
  %v1030 = vunpack.c.l.b16 %v991
  %v1031 = vunpack.c.l.b16 %v992
  %v1032 = vunpack.c.l.b16 %v993
  %v1033 = vunpack.c.l.b16 %v994
  %v1034 = vunpack.c.l.b16 %v995
  %v1035 = vunpack.c.l.b16 %v996
  %v1036 = vpack.c.b16 %v1021, %v1020
  %v1037 = vpack.c.b16 %v1023, %v1022
  %v1038 = vpack.c.b16 %v1025, %v1024
  %v1039 = vpack.c.b16 %v1027, %v1026
  %v1040 = vpack.c.b16 %v1029, %v1028
  %v1041 = vpack.c.b16 %v1031, %v1030
  %v1042 = vpack.c.b16 %v1033, %v1032
  %v1043 = vpack.c.b16 %v1035, %v1034
  %1052 = vmatprep.subr.bf16.mxu0 0
  %1053 = vmatpush1.bf16.msra.mxu0 %v1036
  %1054 = vmatprep.subr.bf16.mxu0 0
  %1055 = vmatpush1.bf16.msra.mxu0 %v1037
  %1056 = vmatprep.subr.bf16.mxu0 0
  %1057 = vmatpush1.bf16.msra.mxu0 %v1038
  %1058 = vmatprep.subr.bf16.mxu0 0
  %1059 = vmatpush1.bf16.msra.mxu0 %v1039
  %1060 = vmatprep.subr.bf16.mxu0 0
  %1061 = vmatpush1.bf16.msra.mxu0 %v1040
  %1062 = vmatprep.subr.bf16.mxu0 0
  %1063 = vmatpush1.bf16.msra.mxu0 %v1041
  %1064 = vmatprep.subr.bf16.mxu0 0
  %1065 = vmatpush1.bf16.msra.mxu0 %v1042
  %1066 = vmatprep.subr.bf16.mxu0 0
  %1067 = vmatpush1.bf16.msra.mxu0 %v1043
  %1068 = vmatprep.subr.bf16.mxu0 0
  %1069 = vmatpush1.bf16.msra.mxu0 0
  %1070 = vmatprep.subr.bf16.mxu0 0
  %1071 = vmatpush1.bf16.msra.mxu0 0
  %1072 = vmatprep.subr.bf16.mxu0 0
  %1073 = vmatpush1.bf16.msra.mxu0 0
  %1074 = vmatprep.subr.bf16.mxu0 0
  %1075 = vmatpush1.bf16.msra.mxu0 0
  %1076 = vmatprep.subr.bf16.mxu0 0
  %1077 = vmatpush1.bf16.msra.mxu0 0
  %1078 = vmatprep.subr.bf16.mxu0 0
  %1079 = vmatpush1.bf16.msra.mxu0 0
  %1080 = vmatprep.subr.bf16.mxu0 0
  %1081 = vmatpush1.bf16.msra.mxu0 0
  %1082 = vmatprep.subr.bf16.mxu0 0
  %1083 = vmatpush1.bf16.msra.mxu0 0
  %1084 = vmatprep.mubr.bf16.mxu0 0
  %1085 = vmatmul.mubr.bf16.gmra.mrb[0].mxu0 %v980
  %v1086 = vpop.f32.mrb[0].mxu0
  %v1087 = vadd.f32 %v1002, %v1086
  %v1088 = vpop.f32.mrb[0].mxu0
  %v1089 = vpop.f32.mrb[0].mxu0
  %v1090 = vadd.f32 %v1002, %v1089
  %v1091 = vpop.f32.mrb[0].mxu0
  %1092 = vdwg.mxu0
  %1093 = vst [vmem:[%s13] sm:$0xff] %v1087
  %1094 = vst [vmem:[%s13 + $0x8] sm:$0xff] %v1090
  // Predicated region
  $region54: #{node_classifier_forward.1} parent=0 // pred_check
    _
  $region55: #{node_classifier_forward.1} parent=0 // pred_check_branch
    %1096 = sbr.rel (0) target = $region57
  $region56: #{node_classifier_forward.1} parent=0 // pred_region
    _
  $region57: #{node_classifier_forward.1} parent=0 // pred_fallthru
    _
  // Predicated region
  $region58: #{node_classifier_forward.1} parent=0 // pred_check
    _
  $region59: #{node_classifier_forward.1} parent=0 // pred_check_branch
    %1098 = sbr.rel (0) target = $region61
  $region60: #{node_classifier_forward.1} parent=0 // pred_region
    _
  $region61: #{node_classifier_forward.1} parent=0 // pred_fallthru
    _

</llo_original>
